<compile_context>
chip_gen: v7x
topology: tpu7x:2x2x1
jax: 0.10.0
libtpu: 0.0.40
codegen_flags: <defaults>
</compile_context>

<pallas_src>
import jax
import jax.numpy as jnp
from jax.experimental import pallas as pl
from jax.experimental.pallas import tpu as pltpu

HIDDEN = 256      # width of linear1b / linear2
F_IN = 4          # bidirectional dense_input features (linear1b in_features)
F_OUT = 1         # regressor -> num_outputs = 1


def dense_layer_b_kernel(x_ref, w1_ref, b1_ref, w2_ref, b2_ref, w3_ref, b3_ref, o_ref):
    """One batch tile of motif_finder.dense_layer_b."""
    x = x_ref[...]                                   # [TB, 4] f32
    w1 = w1_ref[...]                                 # [4, 256]
    # Layer 1 (4 -> 256) as four broadcast FMAs on the VPU; bias folded into the chain.
    h1 = (x[:, 0:1] * w1[0:1, :]
          + x[:, 1:2] * w1[1:2, :]
          + x[:, 2:3] * w1[2:3, :]
          + x[:, 3:4] * w1[3:4, :]
          + b1_ref[...])
    h1 = jnp.maximum(h1, 0.0)                        # ReLU
    # Layer 2 (256 -> 256): the only real-FLOP matmul -> MXU.
    h2 = jnp.dot(h1, w2_ref[...], preferred_element_type=jnp.float32) + b2_ref[...]
    h2 = h2 * h2                                     # Square() preactivation
    # Layer 3 (256 -> 1): VPU multiply + cross-lane reduce; output stays [TB, 1].
    o_ref[...] = jnp.sum(h2 * w3_ref[...], axis=-1, keepdims=True) + b3_ref[...]


def _round_up(n, m):
    return ((n + m - 1) // m) * m


def dense_layer_b(dense_input, params, *, tb=512):
    """dense_input: [B, 4] float -> prediction: [B, 1] float32."""
    B = dense_input.shape[0]
    w1, b1, w2, b2, w3, b3 = params

    tb = min(tb, _round_up(B, 8))          # batch tile: multiple of 8 (f32 sublane)
    Bp = _round_up(B, tb)                  # pad batch to a whole number of tiles
    x = dense_input.astype(jnp.float32)
    if Bp != B:
        x = jnp.pad(x, ((0, Bp - B), (0, 0)))

    weight_bytes = 4 * (w1.size + b1.size + w2.size + b2.size + w3.size + b3.size)
    cost = pl.CostEstimate(
        flops=2 * Bp * (F_IN * HIDDEN + HIDDEN * HIDDEN + HIDDEN),
        transcendentals=0,
        bytes_accessed=Bp * 4 * (F_IN + F_OUT) + weight_bytes,
    )

    out = pl.pallas_call(
        dense_layer_b_kernel,
        out_shape=jax.ShapeDtypeStruct((Bp, F_OUT), jnp.float32),
        grid=(pl.cdiv(Bp, tb),),
        in_specs=[
            pl.BlockSpec((tb, F_IN), lambda i: (i, 0)),   # x: tiled over batch
            pl.BlockSpec(w1.shape, lambda i: (0, 0)),     # weights/biases: resident
            pl.BlockSpec(b1.shape, lambda i: (0, 0)),
            pl.BlockSpec(w2.shape, lambda i: (0, 0)),
            pl.BlockSpec(b2.shape, lambda i: (0, 0)),
            pl.BlockSpec(w3.shape, lambda i: (0, 0)),
            pl.BlockSpec(b3.shape, lambda i: (0, 0)),
        ],
        out_specs=pl.BlockSpec((tb, F_OUT), lambda i: (i, 0)),
        compiler_params=pltpu.CompilerParams(
            dimension_semantics=("parallel",)),           # megacore-shardable on v7x
        cost_estimate=cost,
    )(x, w1, b1, w2, b2, w3, b3)
    return out[:B] if Bp != B else out


def init_params(key):
    """Deterministic stand-in for weight_variable(); biases = ones/100 as in init_weights."""
    k1, k2, k3 = jax.random.split(key, 3)
    # linear1b: torch.nn.Linear(4, 256): weight [256, 4]; stored transposed [4, 256].
    w1 = 0.1 * jax.random.normal(k1, (F_IN, HIDDEN), dtype=jnp.float32)
    b1 = jnp.full((1, HIDDEN), 0.01, jnp.float32)
    # linear2: Linear(256, 256), stored transposed ([in, out]).
    w2 = 0.1 * jax.random.normal(k2, (HIDDEN, HIDDEN), dtype=jnp.float32)
    b2 = jnp.full((1, HIDDEN), 0.01, jnp.float32)
    # linear3: Linear(256, 1): torch weight is [1, 256]; kept as a lane-dense row.
    w3 = 0.1 * jax.random.normal(k3, (F_OUT, HIDDEN), dtype=jnp.float32)
    b3 = jnp.full((1, F_OUT), 0.01, jnp.float32)
    return (w1, b1, w2, b2, w3, b3)


def motif_finder_forward(items, dense_input, params, *, tb=512):
    """Mirrors motif_finder.forward for bidirectional=True, use_likelihood_ratio=False.

    items = [coded_sequences, embeddings_sequences, mask_tensor] (only consumed
    by the missing blsgm model — see TODO above); `dense_input` stands in for
    self.motif_model(items, bidirectional=True).
    """
    del items  # TODO(synk): would be consumed by blsgm to produce dense_input.
    return dense_layer_b(dense_input, params, tb=tb)


def _reference(dense_input, params):
    w1, b1, w2, b2, w3, b3 = params
    hp = jax.lax.Precision.HIGHEST
    x = dense_input.astype(jnp.float32)
    h1 = jnp.maximum(jnp.dot(x, w1, precision=hp) + b1, 0.0)
    h2 = jnp.dot(h1, w2, precision=hp) + b2
    h2 = h2 * h2
    return jnp.dot(h2, w3.T, precision=hp) + b3


if __name__ == "__main__":
    key = jax.random.PRNGKey(0)
    k_par, k_cs, k_emb, k_mask, k_di = jax.random.split(key, 5)

    B, L, A = 20, 16, 4  # batch, sequence length, alphabet size (A/C/G/T one-hot)
    # Inputs that motif_finder.forward would receive (consumed by blsgm):
    coded_sequences = jax.random.randint(k_cs, (B, L), 0, A).astype(jnp.int32)
    embeddings_sequences = jax.random.normal(k_emb, (B, L, A), dtype=jnp.float32)
    mask_tensor = jnp.ones((B, L), dtype=jnp.float32)
    items = [coded_sequences, embeddings_sequences, mask_tensor]

    # Stand-in for the blsgm output (bidirectional -> 4 summary features per sequence).
    dense_input = jax.random.normal(k_di, (B, F_IN), dtype=jnp.float32)

    params = init_params(k_par)

    # tb=8 exercises a multi-step batch grid plus a padded tail tile at small B.
    pred = motif_finder_forward(items, dense_input, params, tb=8)
    pred = jax.block_until_ready(pred)

    ref = _reference(dense_input, params)
    assert pred.shape == (B, F_OUT), pred.shape
    assert jnp.allclose(pred, ref, rtol=1e-4, atol=1e-4), float(jnp.max(jnp.abs(pred - ref)))

    print("KERNEL_OK")
</pallas_src>

<mosaic_0001>
module attributes {stable_mosaic.version = 11 : i64} {
  func.func @dense_layer_b_kernel(%arg0: i32, %arg1: memref<8x4xf32, #tpu.memory_space<vmem>>, %arg2: memref<4x256xf32, #tpu.memory_space<vmem>>, %arg3: memref<1x256xf32, #tpu.memory_space<vmem>>, %arg4: memref<256x256xf32, #tpu.memory_space<vmem>>, %arg5: memref<1x256xf32, #tpu.memory_space<vmem>>, %arg6: memref<1x256xf32, #tpu.memory_space<vmem>>, %arg7: memref<1x1xf32, #tpu.memory_space<vmem>>, %arg8: memref<8x1xf32, #tpu.memory_space<vmem>>) attributes {dimension_semantics = [#tpu.dimension_semantics<parallel>], iteration_bounds = array<i64: 3>, scalar_prefetch = 0 : i64, scratch_operands = 0 : i64, tpu.core_type = #tpu.core_type<tc>, window_params = [{transform_indices = @transform_0, window_bounds = array<i64: 8, 4>}, {pipeline_mode = #tpu.pipeline_mode<synchronous>, transform_indices = @transform_1, window_bounds = array<i64: 4, 256>}, {pipeline_mode = #tpu.pipeline_mode<synchronous>, transform_indices = @transform_2, window_bounds = array<i64: 1, 256>}, {pipeline_mode = #tpu.pipeline_mode<synchronous>, transform_indices = @transform_3, window_bounds = array<i64: 256, 256>}, {pipeline_mode = #tpu.pipeline_mode<synchronous>, transform_indices = @transform_4, window_bounds = array<i64: 1, 256>}, {pipeline_mode = #tpu.pipeline_mode<synchronous>, transform_indices = @transform_5, window_bounds = array<i64: 1, 256>}, {pipeline_mode = #tpu.pipeline_mode<synchronous>, transform_indices = @transform_6, window_bounds = array<i64: 1, 1>}, {transform_indices = @transform_7, window_bounds = array<i64: 8, 1>}]} {
    %c0 = arith.constant 0 : index
    %c0_0 = arith.constant 0 : index
    %0 = vector.load %arg1[%c0, %c0_0] : memref<8x4xf32, #tpu.memory_space<vmem>>, vector<8x4xf32>
    %c0_1 = arith.constant 0 : index
    %c0_2 = arith.constant 0 : index
    %1 = vector.load %arg2[%c0_1, %c0_2] : memref<4x256xf32, #tpu.memory_space<vmem>>, vector<4x256xf32>
    %2 = vector.extract_strided_slice %0 {offsets = [0, 0], sizes = [8, 1], strides = [1, 1]} : vector<8x4xf32> to vector<8x1xf32>
    %3 = vector.extract_strided_slice %1 {offsets = [0, 0], sizes = [1, 256], strides = [1, 1]} : vector<4x256xf32> to vector<1x256xf32>
    %4 = vector.broadcast %2 : vector<8x1xf32> to vector<8x256xf32>
    %5 = vector.broadcast %3 : vector<1x256xf32> to vector<8x256xf32>
    %6 = arith.mulf %4, %5 : vector<8x256xf32>
    %7 = vector.extract_strided_slice %0 {offsets = [0, 1], sizes = [8, 1], strides = [1, 1]} : vector<8x4xf32> to vector<8x1xf32>
    %8 = vector.extract_strided_slice %1 {offsets = [1, 0], sizes = [1, 256], strides = [1, 1]} : vector<4x256xf32> to vector<1x256xf32>
    %9 = vector.broadcast %7 : vector<8x1xf32> to vector<8x256xf32>
    %10 = vector.broadcast %8 : vector<1x256xf32> to vector<8x256xf32>
    %11 = arith.mulf %9, %10 : vector<8x256xf32>
    %12 = arith.addf %6, %11 : vector<8x256xf32>
    %13 = vector.extract_strided_slice %0 {offsets = [0, 2], sizes = [8, 1], strides = [1, 1]} : vector<8x4xf32> to vector<8x1xf32>
    %14 = vector.extract_strided_slice %1 {offsets = [2, 0], sizes = [1, 256], strides = [1, 1]} : vector<4x256xf32> to vector<1x256xf32>
    %15 = vector.broadcast %13 : vector<8x1xf32> to vector<8x256xf32>
    %16 = vector.broadcast %14 : vector<1x256xf32> to vector<8x256xf32>
    %17 = arith.mulf %15, %16 : vector<8x256xf32>
    %18 = arith.addf %12, %17 : vector<8x256xf32>
    %19 = vector.extract_strided_slice %0 {offsets = [0, 3], sizes = [8, 1], strides = [1, 1]} : vector<8x4xf32> to vector<8x1xf32>
    %20 = vector.extract_strided_slice %1 {offsets = [3, 0], sizes = [1, 256], strides = [1, 1]} : vector<4x256xf32> to vector<1x256xf32>
    %21 = vector.broadcast %19 : vector<8x1xf32> to vector<8x256xf32>
    %22 = vector.broadcast %20 : vector<1x256xf32> to vector<8x256xf32>
    %23 = arith.mulf %21, %22 : vector<8x256xf32>
    %24 = arith.addf %18, %23 : vector<8x256xf32>
    %c0_3 = arith.constant 0 : index
    %c0_4 = arith.constant 0 : index
    %25 = vector.load %arg3[%c0_3, %c0_4] : memref<1x256xf32, #tpu.memory_space<vmem>>, vector<1x256xf32>
    %26 = vector.broadcast %25 : vector<1x256xf32> to vector<8x256xf32>
    %27 = arith.addf %24, %26 : vector<8x256xf32>
    %cst = arith.constant 0.000000e+00 : f32
    %28 = vector.broadcast %cst : f32 to vector<8x256xf32>
    %29 = arith.maximumf %27, %28 : vector<8x256xf32>
    %c0_5 = arith.constant 0 : index
    %c0_6 = arith.constant 0 : index
    %30 = vector.load %arg4[%c0_5, %c0_6] : memref<256x256xf32, #tpu.memory_space<vmem>>, vector<256x256xf32>
    %cst_7 = arith.constant dense<0.000000e+00> : vector<8x256xf32>
    %31 = tpu.matmul %29, %30, %cst_7 {dimension_numbers = #tpu.dot_dimension_numbers<[1], [0], [0], [1], [0, 0, 1, 1], [], []>} : vector<8x256xf32>, vector<256x256xf32>, vector<8x256xf32> -> vector<8x256xf32>
    %c0_8 = arith.constant 0 : index
    %c0_9 = arith.constant 0 : index
    %32 = vector.load %arg5[%c0_8, %c0_9] : memref<1x256xf32, #tpu.memory_space<vmem>>, vector<1x256xf32>
    %33 = vector.broadcast %32 : vector<1x256xf32> to vector<8x256xf32>
    %34 = arith.addf %31, %33 : vector<8x256xf32>
    %35 = arith.mulf %34, %34 : vector<8x256xf32>
    %c0_10 = arith.constant 0 : index
    %c0_11 = arith.constant 0 : index
    %36 = vector.load %arg6[%c0_10, %c0_11] : memref<1x256xf32, #tpu.memory_space<vmem>>, vector<1x256xf32>
    %37 = vector.broadcast %36 : vector<1x256xf32> to vector<8x256xf32>
    %38 = arith.mulf %35, %37 : vector<8x256xf32>
    %cst_12 = arith.constant dense<0.000000e+00> : vector<8xf32>
    %39 = vector.multi_reduction <add>, %38, %cst_12 [1] : vector<8x256xf32> to vector<8xf32>
    %40 = vector.shape_cast %39 : vector<8xf32> to vector<8x1xf32>
    %c0_13 = arith.constant 0 : index
    %c0_14 = arith.constant 0 : index
    %41 = vector.load %arg7[%c0_13, %c0_14] : memref<1x1xf32, #tpu.memory_space<vmem>>, vector<1x1xf32>
    %42 = vector.broadcast %41 : vector<1x1xf32> to vector<8x1xf32>
    %43 = arith.addf %40, %42 : vector<8x1xf32>
    %c0_15 = arith.constant 0 : index
    %c0_16 = arith.constant 0 : index
    %44 = vector.load %arg8[%c0_15, %c0_16] : memref<8x1xf32, #tpu.memory_space<vmem>>, vector<8x1xf32>
    tpu.vector_store %arg8[%c0_15, %c0_16], %43 {strides = array<i32>} : memref<8x1xf32, #tpu.memory_space<vmem>>, vector<8x1xf32>,
    return
  }
  func.func @transform_0(%arg0: i32) -> (i32, i32) {
    %c0_i32 = arith.constant 0 : i32
    %c0_i32_0 = arith.constant 0 : i32
    return %arg0, %c0_i32 : i32, i32
  }
  func.func @transform_1(%arg0: i32) -> (i32, i32) {
    %c0_i32 = arith.constant 0 : i32
    %c0_i32_0 = arith.constant 0 : i32
    %c0_i32_1 = arith.constant 0 : i32
    return %c0_i32, %c0_i32_0 : i32, i32
  }
  func.func @transform_2(%arg0: i32) -> (i32, i32) {
    %c0_i32 = arith.constant 0 : i32
    %c0_i32_0 = arith.constant 0 : i32
    %c0_i32_1 = arith.constant 0 : i32
    return %c0_i32, %c0_i32_0 : i32, i32
  }
  func.func @transform_3(%arg0: i32) -> (i32, i32) {
    %c0_i32 = arith.constant 0 : i32
    %c0_i32_0 = arith.constant 0 : i32
    %c0_i32_1 = arith.constant 0 : i32
    return %c0_i32, %c0_i32_0 : i32, i32
  }
  func.func @transform_4(%arg0: i32) -> (i32, i32) {
    %c0_i32 = arith.constant 0 : i32
    %c0_i32_0 = arith.constant 0 : i32
    %c0_i32_1 = arith.constant 0 : i32
    return %c0_i32, %c0_i32_0 : i32, i32
  }
  func.func @transform_5(%arg0: i32) -> (i32, i32) {
    %c0_i32 = arith.constant 0 : i32
    %c0_i32_0 = arith.constant 0 : i32
    %c0_i32_1 = arith.constant 0 : i32
    return %c0_i32, %c0_i32_0 : i32, i32
  }
  func.func @transform_6(%arg0: i32) -> (i32, i32) {
    %c0_i32 = arith.constant 0 : i32
    %c0_i32_0 = arith.constant 0 : i32
    %c0_i32_1 = arith.constant 0 : i32
    return %c0_i32, %c0_i32_0 : i32, i32
  }
  func.func @transform_7(%arg0: i32) -> (i32, i32) {
    %c0_i32 = arith.constant 0 : i32
    %c0_i32_0 = arith.constant 0 : i32
    return %arg0, %c0_i32 : i32, i32
  }
}

</mosaic_0001>

<llo_original>
// kernel: tpu_custom_call.1
$region0: #{tpu_custom_call.1}
  #allocation0 [shape = 'u32[]', space=smem, size = 0x4, offset = 0x4, fixed_abs, tag = 'smem constant byte address 0x4 - core index']
  #allocation1 [shape = 'u32[144,128]{1,0:T(1,128)}', space=vmem, size = 0x12000, scoped, tag = 'internal scratch']
  #allocation2 [shape = 'f32[1,1]{1,0:T(1,128)S(1)}', space=vmem, size = 0x200, scoped, tag = 'scoped memory for tpu_custom_call.1']
  %s0 = inlined_call_operand.vmem [shape: f32[24,4], index: 0, kind: input, shape index: {}]
  %s1 = inlined_call_operand.vmem [shape: f32[4,256], index: 1, kind: input, shape index: {}]
  %s2 = inlined_call_operand.vmem [shape: f32[1,256], index: 2, kind: input, shape index: {}]
  %s3 = inlined_call_operand.hbm [shape: f32[256,256], index: 3, kind: input, shape index: {}]
  %s4 = inlined_call_operand.vmem [shape: f32[1,256], index: 4, kind: input, shape index: {}]
  %s5 = inlined_call_operand.vmem [shape: f32[1,256], index: 5, kind: input, shape index: {}]
  %s6 = inlined_call_operand.<no memory space> [shape: f32[1,1], index: 6, kind: input, shape index: {}]
  %s7 = inlined_call_operand.vmem [shape: f32[24,1], index: 7, kind: output, shape index: {}]
  %s8 = sld [smem:[#allocation0]]
  $region65: #{tpu_custom_call.1} parent=0
    _
  %s10 = ssub.s32 1, %s8
  %s11 = scalar_select 0, %s10, %s8
  %v12 = vstv %s6
  %13 = vst [vmem:[#allocation2] sm:$0x1] %v12
  $region1: #{tpu_custom_call.1} parent=0
    #allocation3 [shape = 'u8[262144]{0}', space=vmem, size = 0x40000, scoped, tag = 'input window, operand 3, single buffered']
    #allocation4 [shape = 's32[2]{0}', space=sflag, size = 0x8, scoped, tag = 'scoped memory for tpu_custom_call.1']
    %14 = vsyncpa [#allocation4], 0
    loop: start=0, step=1, limit=5
    $region2: #{tpu_custom_call.1} parent=1 // loop_pre_header
      _
    $region3: #{tpu_custom_call.1} parent=1 // loop_header
      %s16 = sphi 0, %s20
      %p17 = scmp.ge.s32.totalorder %s16, 5
      %s26 = sphi 0, %s28
      %s29 = sphi 0, %s26
      %s30 = sphi 0, %s29
      %s46 = sphi 0, %s30
      %s50 = sphi 0, %s50
      %s52 = sphi 0, %s50
      %s53 = sphi 0, %s52
      %s67 = sphi 0, %s53
      %s71 = sphi 0, %s71
      %s73 = sphi 0, %s71
      %s74 = sphi 0, %s73
      %s88 = sphi 0, %s74
      %s92 = sphi 0, %s92
      %s94 = sphi 0, %s92
      %s95 = sphi 0, %s94
      %s109 = sphi 0, %s95
      %s113 = sphi 0, %s113
      %s115 = sphi 0, %s113
      %s116 = sphi 0, %s115
      %s130 = sphi 0, %s116
      %s134 = sphi 0, %s134
      %s136 = sphi 0, %s134
      %s137 = sphi 0, %s136
      %s151 = sphi 0, %s137
      %s155 = sphi 0, %s155
      %s157 = sphi 0, %s155
      %s158 = sphi 0, %s157
      %s172 = sphi 0, %s158
      %s178 = sphi 0, %s180
      %s181 = sphi 0, %s178
      %s182 = sphi 0, %s181
      %s198 = sphi 0, %s182
    $region4: #{tpu_custom_call.1} parent=1 // loop_header_branch
      %19 = sbr.rel (%p17) target = $region8
    $region5: #{tpu_custom_call.1} parent=1 // loop_body
      %s21 = ssub.s32 %s16, 1
      %s22 = ssub.s32 %s16, 2
      %s23 = sadd.s32 %s16, 1
      %s24 = ssub.s32 %s16, %s23
      %p25 = scmp.eq.s32.totalorder %s24, 0
      %s27 = sadd.s32 %s26, 1
      %s28 = scalar_select %p25, %s26, %s27
      %p31 = pneg %p25
      %p32 = scmp.eq.s32.totalorder %s16, 2
      %p33 = por %p31, %p32
      %p34 = scmp.ne.s32.totalorder %s26, %s29
      %p35 = scmp.eq.s32.totalorder %s16, 0
      %p36 = por %p34, %p35
      %p37 = scmp.ne.s32.totalorder %s26, %s29
      %p38 = scmp.eq.s32.totalorder %s21, 2
      %p39 = por %p37, %p38
      %p40 = scmp.ne.s32.totalorder %s29, %s30
      %p41 = scmp.eq.s32.totalorder %s21, 0
      %p42 = por %p40, %p41
      %p43 = scmp.ne.s32.totalorder %s29, %s30
      %p44 = scmp.eq.s32.totalorder %s22, 2
      %p45 = por %p43, %p44
      %p47 = scmp.ne.s32.totalorder %s30, %s46
      %p48 = scmp.eq.s32.totalorder %s22, 0
      %p49 = por %p47, %p48
      %s51 = sadd.s32 %s50, 1
      %p54 = scmp.eq.s32.totalorder %s16, 2
      %p55 = scmp.ne.s32.totalorder %s50, %s52
      %p56 = scmp.eq.s32.totalorder %s16, 0
      %p57 = por %p55, %p56
      %p58 = scmp.ne.s32.totalorder %s50, %s52
      %p59 = scmp.eq.s32.totalorder %s21, 2
      %p60 = por %p58, %p59
      %p61 = scmp.ne.s32.totalorder %s52, %s53
      %p62 = scmp.eq.s32.totalorder %s21, 0
      %p63 = por %p61, %p62
      %p64 = scmp.ne.s32.totalorder %s52, %s53
      %p65 = scmp.eq.s32.totalorder %s22, 2
      %p66 = por %p64, %p65
      %p68 = scmp.ne.s32.totalorder %s53, %s67
      %p69 = scmp.eq.s32.totalorder %s22, 0
      %p70 = por %p68, %p69
      %s72 = sadd.s32 %s71, 1
      %p75 = scmp.eq.s32.totalorder %s16, 2
      %p76 = scmp.ne.s32.totalorder %s71, %s73
      %p77 = scmp.eq.s32.totalorder %s16, 0
      %p78 = por %p76, %p77
      %p79 = scmp.ne.s32.totalorder %s71, %s73
      %p80 = scmp.eq.s32.totalorder %s21, 2
      %p81 = por %p79, %p80
      %p82 = scmp.ne.s32.totalorder %s73, %s74
      %p83 = scmp.eq.s32.totalorder %s21, 0
      %p84 = por %p82, %p83
      %p85 = scmp.ne.s32.totalorder %s73, %s74
      %p86 = scmp.eq.s32.totalorder %s22, 2
      %p87 = por %p85, %p86
      %p89 = scmp.ne.s32.totalorder %s74, %s88
      %p90 = scmp.eq.s32.totalorder %s22, 0
      %p91 = por %p89, %p90
      %s93 = sadd.s32 %s92, 1
      %p96 = scmp.eq.s32.totalorder %s16, 2
      %p97 = scmp.ne.s32.totalorder %s92, %s94
      %p98 = scmp.eq.s32.totalorder %s16, 0
      %p99 = por %p97, %p98
      %p100 = scmp.ne.s32.totalorder %s92, %s94
      %p101 = scmp.eq.s32.totalorder %s21, 2
      %p102 = por %p100, %p101
      %p103 = scmp.ne.s32.totalorder %s94, %s95
      %p104 = scmp.eq.s32.totalorder %s21, 0
      %p105 = por %p103, %p104
      %p106 = scmp.ne.s32.totalorder %s94, %s95
      %p107 = scmp.eq.s32.totalorder %s22, 2
      %p108 = por %p106, %p107
      %p110 = scmp.ne.s32.totalorder %s95, %s109
      %p111 = scmp.eq.s32.totalorder %s22, 0
      %p112 = por %p110, %p111
      %s114 = sadd.s32 %s113, 1
      %p117 = scmp.eq.s32.totalorder %s16, 2
      %p118 = scmp.ne.s32.totalorder %s113, %s115
      %p119 = scmp.eq.s32.totalorder %s16, 0
      %p120 = por %p118, %p119
      %p121 = scmp.ne.s32.totalorder %s113, %s115
      %p122 = scmp.eq.s32.totalorder %s21, 2
      %p123 = por %p121, %p122
      %p124 = scmp.ne.s32.totalorder %s115, %s116
      %p125 = scmp.eq.s32.totalorder %s21, 0
      %p126 = por %p124, %p125
      %p127 = scmp.ne.s32.totalorder %s115, %s116
      %p128 = scmp.eq.s32.totalorder %s22, 2
      %p129 = por %p127, %p128
      %p131 = scmp.ne.s32.totalorder %s116, %s130
      %p132 = scmp.eq.s32.totalorder %s22, 0
      %p133 = por %p131, %p132
      %s135 = sadd.s32 %s134, 1
      %p138 = scmp.eq.s32.totalorder %s16, 2
      %p139 = scmp.ne.s32.totalorder %s134, %s136
      %p140 = scmp.eq.s32.totalorder %s16, 0
      %p141 = por %p139, %p140
      %p142 = scmp.ne.s32.totalorder %s134, %s136
      %p143 = scmp.eq.s32.totalorder %s21, 2
      %p144 = por %p142, %p143
      %p145 = scmp.ne.s32.totalorder %s136, %s137
      %p146 = scmp.eq.s32.totalorder %s21, 0
      %p147 = por %p145, %p146
      %p148 = scmp.ne.s32.totalorder %s136, %s137
      %p149 = scmp.eq.s32.totalorder %s22, 2
      %p150 = por %p148, %p149
      %p152 = scmp.ne.s32.totalorder %s137, %s151
      %p153 = scmp.eq.s32.totalorder %s22, 0
      %p154 = por %p152, %p153
      %s156 = sadd.s32 %s155, 1
      %p159 = scmp.eq.s32.totalorder %s16, 2
      %p160 = scmp.ne.s32.totalorder %s155, %s157
      %p161 = scmp.eq.s32.totalorder %s16, 0
      %p162 = por %p160, %p161
      %p163 = scmp.ne.s32.totalorder %s155, %s157
      %p164 = scmp.eq.s32.totalorder %s21, 2
      %p165 = por %p163, %p164
      %p166 = scmp.ne.s32.totalorder %s157, %s158
      %p167 = scmp.eq.s32.totalorder %s21, 0
      %p168 = por %p166, %p167
      %p169 = scmp.ne.s32.totalorder %s157, %s158
      %p170 = scmp.eq.s32.totalorder %s22, 2
      %p171 = por %p169, %p170
      %p173 = scmp.ne.s32.totalorder %s158, %s172
      %p174 = scmp.eq.s32.totalorder %s22, 0
      %p175 = por %p173, %p174
      %s176 = ssub.s32 %s16, %s23
      %p177 = scmp.eq.s32.totalorder %s176, 0
      %s179 = sadd.s32 %s178, 1
      %s180 = scalar_select %p177, %s178, %s179
      %p183 = pneg %p177
      %p184 = scmp.eq.s32.totalorder %s16, 2
      %p185 = por %p183, %p184
      %p186 = scmp.ne.s32.totalorder %s178, %s181
      %p187 = scmp.eq.s32.totalorder %s16, 0
      %p188 = por %p186, %p187
      %p189 = scmp.ne.s32.totalorder %s178, %s181
      %p190 = scmp.eq.s32.totalorder %s21, 2
      %p191 = por %p189, %p190
      %p192 = scmp.ne.s32.totalorder %s181, %s182
      %p193 = scmp.eq.s32.totalorder %s21, 0
      %p194 = por %p192, %p193
      %p195 = scmp.ne.s32.totalorder %s181, %s182
      %p196 = scmp.eq.s32.totalorder %s22, 2
      %p197 = por %p195, %p196
      %p199 = scmp.ne.s32.totalorder %s182, %s198
      %p200 = scmp.eq.s32.totalorder %s22, 0
      %p201 = por %p199, %p200
      %p202 = scmp.le.s32.totalorder 1, %s16
      %p203 = scmp.lt.s32.totalorder %s16, 4
      %p204 = pnand %p202, %p203
      %p205 = pneg %p204
      // Predicated region
      $region9: #{tpu_custom_call.1} parent=5 // pred_check
        _
      $region10: #{tpu_custom_call.1} parent=5 // pred_check_branch
        %207 = sbr.rel (%p204) target = $region12
      $region11: #{tpu_custom_call.1} parent=5 // pred_region
        %s208 = ssub.s32 %s16, 1
        // Predicated region
        $region13: #{tpu_custom_call.1} parent=11 // pred_check
          %p209 = pneg %p63
        $region14: #{tpu_custom_call.1} parent=11 // pred_check_branch
          %211 = sbr.rel (%p209) target = $region16
        $region15: #{tpu_custom_call.1} parent=11 // pred_region
          _
        $region16: #{tpu_custom_call.1} parent=11 // pred_fallthru
          _
        // Predicated region
        $region17: #{tpu_custom_call.1} parent=11 // pred_check
          %p212 = pneg %p84
        $region18: #{tpu_custom_call.1} parent=11 // pred_check_branch
          %214 = sbr.rel (%p212) target = $region20
        $region19: #{tpu_custom_call.1} parent=11 // pred_region
          _
        $region20: #{tpu_custom_call.1} parent=11 // pred_fallthru
          _
        // Predicated region
        $region21: #{tpu_custom_call.1} parent=11 // pred_check
          %p215 = pneg %p105
        $region22: #{tpu_custom_call.1} parent=11 // pred_check_branch
          %217 = sbr.rel (%p215) target = $region24
        $region23: #{tpu_custom_call.1} parent=11 // pred_region
          %s219 = ssub.s32 8192, 8192
          %220 = vsyncadd [#allocation4], %s219
          %s221 = sshll.u32 [#allocation3], 4
          %s222 = int_to_ptr.vmem [resolvable:$true] %s221
          %227 = dma.hbm_to_vmem [thread:$0]  %s3, 8192, %s222, [#allocation4], 256, 256, 16
        $region24: #{tpu_custom_call.1} parent=11 // pred_fallthru
          _
        // Predicated region
        $region25: #{tpu_custom_call.1} parent=11 // pred_check
          %p228 = pneg %p126
        $region26: #{tpu_custom_call.1} parent=11 // pred_check_branch
          %230 = sbr.rel (%p228) target = $region28
        $region27: #{tpu_custom_call.1} parent=11 // pred_region
          _
        $region28: #{tpu_custom_call.1} parent=11 // pred_fallthru
          _
        // Predicated region
        $region29: #{tpu_custom_call.1} parent=11 // pred_check
          %p231 = pneg %p147
        $region30: #{tpu_custom_call.1} parent=11 // pred_check_branch
          %233 = sbr.rel (%p231) target = $region32
        $region31: #{tpu_custom_call.1} parent=11 // pred_region
          _
        $region32: #{tpu_custom_call.1} parent=11 // pred_fallthru
          _
        // Predicated region
        $region33: #{tpu_custom_call.1} parent=11 // pred_check
          %p234 = pneg %p168
        $region34: #{tpu_custom_call.1} parent=11 // pred_check_branch
          %236 = sbr.rel (%p234) target = $region36
        $region35: #{tpu_custom_call.1} parent=11 // pred_region
          _
        $region36: #{tpu_custom_call.1} parent=11 // pred_fallthru
          _
      $region12: #{tpu_custom_call.1} parent=5 // pred_fallthru
        _
      %p237 = scmp.lt.s32.totalorder %s16, 3
      // Predicated region
      $region37: #{tpu_custom_call.1} parent=5 // pred_check
        %p238 = pneg %p237
      $region38: #{tpu_custom_call.1} parent=5 // pred_check_branch
        %240 = sbr.rel (%p238) target = $region40
      $region39: #{tpu_custom_call.1} parent=5 // pred_region
        // Predicated region
        $region41: #{tpu_custom_call.1} parent=39 // pred_check
          %p241 = pneg %p36
        $region42: #{tpu_custom_call.1} parent=39 // pred_check_branch
          %243 = sbr.rel (%p241) target = $region44
        $region43: #{tpu_custom_call.1} parent=39 // pred_region
          %p244 = scmp.lt.s32.totalorder %s16, 2
          %s245 = scalar_select %p244, %s16, 2
          %s246 = smul.addr %s245, 8
          %s247 = scalar_lea.vmem %s0, %s246
        $region44: #{tpu_custom_call.1} parent=39 // pred_fallthru
          _
      $region40: #{tpu_custom_call.1} parent=5 // pred_fallthru
        _
      %p248 = scmp.le.s32.totalorder 1, %s16
      %p249 = scmp.lt.s32.totalorder %s16, 4
      %p250 = pnand %p248, %p249
      %p251 = pneg %p250
      // Predicated region
      $region45: #{tpu_custom_call.1} parent=5 // pred_check
        _
      $region46: #{tpu_custom_call.1} parent=5 // pred_check_branch
        %253 = sbr.rel (%p250) target = $region48
      $region47: #{tpu_custom_call.1} parent=5 // pred_region
        %s254 = ssub.s32 %s16, 1
        // Predicated region
        $region49: #{tpu_custom_call.1} parent=47 // pred_check
          %p255 = pneg %p105
        $region50: #{tpu_custom_call.1} parent=47 // pred_check_branch
          %257 = sbr.rel (%p255) target = $region52
        $region51: #{tpu_custom_call.1} parent=47 // pred_region
          %258 = dma.done [#allocation4], 8192
        $region52: #{tpu_custom_call.1} parent=47 // pred_fallthru
          _
        %p259 = scmp.lt.s32.totalorder %s21, 2
        %s260 = scalar_select %p259, %s21, 2
        %s261 = smul.addr %s260, 8
        %s262 = scalar_lea.vmem %s0, %s261
        %p263 = pneg %p42
        %p264 = pneg %p39
        %p265 = pneg %p63
        %p266 = pneg %p60
        %p267 = pneg %p84
        %p268 = pneg %p81
        %p269 = pneg %p105
        %p270 = pneg %p102
        %p271 = pneg %p126
        %p272 = pneg %p123
        %p273 = pneg %p147
        %p274 = pneg %p144
        %p275 = pneg %p168
        %p276 = pneg %p165
        %p277 = pneg %p194
        %p278 = pneg %p191
        %p279 = scmp.lt.s32.totalorder %s21, 2
        %s280 = scalar_select %p279, %s21, 2
        %s281 = smul.addr %s280, 8
        %s282 = scalar_lea.vmem %s7, %s281
        %p283 = scmp.lt.s32.totalorder %s21, 2
        %s284 = scalar_select %p283, %s21, 2
        %s285 = smul.addr %s284, 8
        %s286 = scalar_lea.vmem %s0, %s285
        %p287 = scmp.lt.s32.totalorder %s21, 2
        %s288 = scalar_select %p287, %s21, 2
        %s289 = smul.addr %s288, 8
        %s290 = scalar_lea.vmem %s7, %s289
        %v291 = vld [vmem:[%s286] sm:$0xff]
        %v292 = vld [vmem:[%s1] sm:$0xff]
        %294 = vset.pattern.permute.xlu0 0
        %295 = vperm.xlu0 %294, %v291
        %v296 = vpop.permute.xlu0 %295
        %v299 = vlaneseq
        %v300 = vshrl.u32 %v299, 7
        %v301 = vsub.s32 0, %v300
        %v302 = vrot.slane %v292, %v301
        %v303 = vlaneseq
        %v304 = vshrl.u32 %v303, 7
        %v305 = vsub.s32 4, %v304
        %v306 = vrot.slane %v292, %v305
        %v309 = vlaneseq
        %v310 = vshrl.u32 %v309, 7
        %v311 = vsub.s32 0, %v310
        %v312 = vrot.slane %v302, %v311
        %v313 = vlaneseq
        %v314 = vshrl.u32 %v313, 7
        %v315 = vsub.s32 0, %v314
        %v316 = vrot.slane %v306, %v315
        %v317 = vmul.f32 %v296, %v312
        %v318 = vmul.f32 %v296, %v316
        %319 = vset.pattern.permute.xlu0 1
        %320 = vperm.xlu0 %319, %v291
        %v321 = vpop.permute.xlu0 %320
        %v323 = vlaneseq
        %v324 = vshrl.u32 %v323, 7
        %v325 = vsub.s32 1, %v324
        %v326 = vrot.slane %v292, %v325
        %v327 = vlaneseq
        %v328 = vshrl.u32 %v327, 7
        %v329 = vsub.s32 5, %v328
        %v330 = vrot.slane %v292, %v329
        %v333 = vlaneseq
        %v334 = vshrl.u32 %v333, 7
        %v335 = vsub.s32 1, %v334
        %v336 = vrot.slane %v326, %v335
        %v337 = vlaneseq
        %v338 = vshrl.u32 %v337, 7
        %v339 = vsub.s32 1, %v338
        %v340 = vrot.slane %v330, %v339
        %v341 = vmul.f32 %v321, %v336
        %v342 = vmul.f32 %v321, %v340
        %v343 = vadd.f32 %v317, %v341
        %v344 = vadd.f32 %v318, %v342
        %345 = vset.pattern.permute.xlu0 2
        %346 = vperm.xlu0 %345, %v291
        %v347 = vpop.permute.xlu0 %346
        %v349 = vlaneseq
        %v350 = vshrl.u32 %v349, 7
        %v351 = vsub.s32 2, %v350
        %v352 = vrot.slane %v292, %v351
        %v353 = vlaneseq
        %v354 = vshrl.u32 %v353, 7
        %v355 = vsub.s32 6, %v354
        %v356 = vrot.slane %v292, %v355
        %v359 = vlaneseq
        %v360 = vshrl.u32 %v359, 7
        %v361 = vsub.s32 2, %v360
        %v362 = vrot.slane %v352, %v361
        %v363 = vlaneseq
        %v364 = vshrl.u32 %v363, 7
        %v365 = vsub.s32 2, %v364
        %v366 = vrot.slane %v356, %v365
        %v367 = vmul.f32 %v347, %v362
        %v368 = vmul.f32 %v347, %v366
        %v369 = vadd.f32 %v343, %v367
        %v370 = vadd.f32 %v344, %v368
        %371 = vset.pattern.permute.xlu0 3
        %372 = vperm.xlu0 %371, %v291
        %v373 = vpop.permute.xlu0 %372
        %v375 = vlaneseq
        %v376 = vshrl.u32 %v375, 7
        %v377 = vsub.s32 3, %v376
        %v378 = vrot.slane %v292, %v377
        %v379 = vlaneseq
        %v380 = vshrl.u32 %v379, 7
        %v381 = vsub.s32 7, %v380
        %v382 = vrot.slane %v292, %v381
        %v385 = vlaneseq
        %v386 = vshrl.u32 %v385, 7
        %v387 = vsub.s32 3, %v386
        %v388 = vrot.slane %v378, %v387
        %v389 = vlaneseq
        %v390 = vshrl.u32 %v389, 7
        %v391 = vsub.s32 3, %v390
        %v392 = vrot.slane %v382, %v391
        %v393 = vmul.f32 %v373, %v388
        %v394 = vmul.f32 %v373, %v392
        %v395 = vadd.f32 %v369, %v393
        %v396 = vadd.f32 %v370, %v394
        %v397 = vld [vmem:[%s2] sm:$0x3]
        %v399 = vlaneseq
        %v400 = vshrl.u32 %v399, 7
        %v401 = vsub.s32 0, %v400
        %v402 = vrot.slane %v397, %v401
        %v403 = vlaneseq
        %v404 = vshrl.u32 %v403, 7
        %v405 = vsub.s32 1, %v404
        %v406 = vrot.slane %v397, %v405
        %v409 = vadd.f32 %v395, %v402
        %v410 = vadd.f32 %v396, %v406
        %v411 = vmax.f32 %v409, 0.0
        %v412 = vmax.f32 %v410, 0.0
        %v413 = vld [vmem:[#allocation3] sm:$0xff]
        %v414 = vld [vmem:[#allocation3 + $0x8] sm:$0xff]
        %v415 = vld [vmem:[#allocation3 + $0x10] sm:$0xff]
        %v416 = vld [vmem:[#allocation3 + $0x18] sm:$0xff]
        %v417 = vld [vmem:[#allocation3 + $0x20] sm:$0xff]
        %v418 = vld [vmem:[#allocation3 + $0x28] sm:$0xff]
        %v419 = vld [vmem:[#allocation3 + $0x30] sm:$0xff]
        %v420 = vld [vmem:[#allocation3 + $0x38] sm:$0xff]
        %v421 = vld [vmem:[#allocation3 + $0x40] sm:$0xff]
        %v422 = vld [vmem:[#allocation3 + $0x48] sm:$0xff]
        %v423 = vld [vmem:[#allocation3 + $0x50] sm:$0xff]
        %v424 = vld [vmem:[#allocation3 + $0x58] sm:$0xff]
        %v425 = vld [vmem:[#allocation3 + $0x60] sm:$0xff]
        %v426 = vld [vmem:[#allocation3 + $0x68] sm:$0xff]
        %v427 = vld [vmem:[#allocation3 + $0x70] sm:$0xff]
        %v428 = vld [vmem:[#allocation3 + $0x78] sm:$0xff]
        %v429 = vld [vmem:[#allocation3 + $0x80] sm:$0xff]
        %v430 = vld [vmem:[#allocation3 + $0x88] sm:$0xff]
        %v431 = vld [vmem:[#allocation3 + $0x90] sm:$0xff]
        %v432 = vld [vmem:[#allocation3 + $0x98] sm:$0xff]
        %v433 = vld [vmem:[#allocation3 + $0xa0] sm:$0xff]
        %v434 = vld [vmem:[#allocation3 + $0xa8] sm:$0xff]
        %v435 = vld [vmem:[#allocation3 + $0xb0] sm:$0xff]
        %v436 = vld [vmem:[#allocation3 + $0xb8] sm:$0xff]
        %v437 = vld [vmem:[#allocation3 + $0xc0] sm:$0xff]
        %v438 = vld [vmem:[#allocation3 + $0xc8] sm:$0xff]
        %v439 = vld [vmem:[#allocation3 + $0xd0] sm:$0xff]
        %v440 = vld [vmem:[#allocation3 + $0xd8] sm:$0xff]
        %v441 = vld [vmem:[#allocation3 + $0xe0] sm:$0xff]
        %v442 = vld [vmem:[#allocation3 + $0xe8] sm:$0xff]
        %v443 = vld [vmem:[#allocation3 + $0xf0] sm:$0xff]
        %v444 = vld [vmem:[#allocation3 + $0xf8] sm:$0xff]
        %v445 = vld [vmem:[#allocation3 + $0x100] sm:$0xff]
        %v446 = vld [vmem:[#allocation3 + $0x108] sm:$0xff]
        %v447 = vld [vmem:[#allocation3 + $0x110] sm:$0xff]
        %v448 = vld [vmem:[#allocation3 + $0x118] sm:$0xff]
        %v449 = vld [vmem:[#allocation3 + $0x120] sm:$0xff]
        %v450 = vld [vmem:[#allocation3 + $0x128] sm:$0xff]
        %v451 = vld [vmem:[#allocation3 + $0x130] sm:$0xff]
        %v452 = vld [vmem:[#allocation3 + $0x138] sm:$0xff]
        %v453 = vld [vmem:[#allocation3 + $0x140] sm:$0xff]
        %v454 = vld [vmem:[#allocation3 + $0x148] sm:$0xff]
        %v455 = vld [vmem:[#allocation3 + $0x150] sm:$0xff]
        %v456 = vld [vmem:[#allocation3 + $0x158] sm:$0xff]
        %v457 = vld [vmem:[#allocation3 + $0x160] sm:$0xff]
        %v458 = vld [vmem:[#allocation3 + $0x168] sm:$0xff]
        %v459 = vld [vmem:[#allocation3 + $0x170] sm:$0xff]
        %v460 = vld [vmem:[#allocation3 + $0x178] sm:$0xff]
        %v461 = vld [vmem:[#allocation3 + $0x180] sm:$0xff]
        %v462 = vld [vmem:[#allocation3 + $0x188] sm:$0xff]
        %v463 = vld [vmem:[#allocation3 + $0x190] sm:$0xff]
        %v464 = vld [vmem:[#allocation3 + $0x198] sm:$0xff]
        %v465 = vld [vmem:[#allocation3 + $0x1a0] sm:$0xff]
        %v466 = vld [vmem:[#allocation3 + $0x1a8] sm:$0xff]
        %v467 = vld [vmem:[#allocation3 + $0x1b0] sm:$0xff]
        %v468 = vld [vmem:[#allocation3 + $0x1b8] sm:$0xff]
        %v469 = vld [vmem:[#allocation3 + $0x1c0] sm:$0xff]
        %v470 = vld [vmem:[#allocation3 + $0x1c8] sm:$0xff]
        %v471 = vld [vmem:[#allocation3 + $0x1d0] sm:$0xff]
        %v472 = vld [vmem:[#allocation3 + $0x1d8] sm:$0xff]
        %v473 = vld [vmem:[#allocation3 + $0x1e0] sm:$0xff]
        %v474 = vld [vmem:[#allocation3 + $0x1e8] sm:$0xff]
        %v475 = vld [vmem:[#allocation3 + $0x1f0] sm:$0xff]
        %v476 = vld [vmem:[#allocation3 + $0x1f8] sm:$0xff]
        %v477 = vld [vmem:[%s4] sm:$0x3]
        %v479 = vlaneseq
        %v480 = vshrl.u32 %v479, 7
        %v481 = vsub.s32 0, %v480
        %v482 = vrot.slane %v477, %v481
        %v483 = vlaneseq
        %v484 = vshrl.u32 %v483, 7
        %v485 = vsub.s32 1, %v484
        %v486 = vrot.slane %v477, %v485
        %489 = vmatprep.subr.mxu0 %v414
        %490 = vmatpush1.msra.mxu0 %v413
        %491 = vmatprep.subr.mxu0 %v416
        %492 = vmatpush1.msra.mxu0 %v415
        %493 = vmatprep.subr.mxu0 %v418
        %494 = vmatpush1.msra.mxu0 %v417
        %495 = vmatprep.subr.mxu0 %v420
        %496 = vmatpush1.msra.mxu0 %v419
        %497 = vmatprep.subr.mxu0 %v422
        %498 = vmatpush1.msra.mxu0 %v421
        %499 = vmatprep.subr.mxu0 %v424
        %500 = vmatpush1.msra.mxu0 %v423
        %501 = vmatprep.subr.mxu0 %v426
        %502 = vmatpush1.msra.mxu0 %v425
        %503 = vmatprep.subr.mxu0 %v428
        %504 = vmatpush1.msra.mxu0 %v427
        %505 = vmatprep.subr.mxu0 %v430
        %506 = vmatpush1.msra.mxu0 %v429
        %507 = vmatprep.subr.mxu0 %v432
        %508 = vmatpush1.msra.mxu0 %v431
        %509 = vmatprep.subr.mxu0 %v434
        %510 = vmatpush1.msra.mxu0 %v433
        %511 = vmatprep.subr.mxu0 %v436
        %512 = vmatpush1.msra.mxu0 %v435
        %513 = vmatprep.subr.mxu0 %v438
        %514 = vmatpush1.msra.mxu0 %v437
        %515 = vmatprep.subr.mxu0 %v440
        %516 = vmatpush1.msra.mxu0 %v439
        %517 = vmatprep.subr.mxu0 %v442
        %518 = vmatpush1.msra.mxu0 %v441
        %519 = vmatprep.subr.mxu0 %v444
        %520 = vmatpush1.msra.mxu0 %v443
        %521 = vmatprep.subr.mxu0 %v446
        %522 = vmatpush1.msra.mxu0 %v445
        %523 = vmatprep.subr.mxu0 %v448
        %524 = vmatpush1.msra.mxu0 %v447
        %525 = vmatprep.subr.mxu0 %v450
        %526 = vmatpush1.msra.mxu0 %v449
        %527 = vmatprep.subr.mxu0 %v452
        %528 = vmatpush1.msra.mxu0 %v451
        %529 = vmatprep.subr.mxu0 %v454
        %530 = vmatpush1.msra.mxu0 %v453
        %531 = vmatprep.subr.mxu0 %v456
        %532 = vmatpush1.msra.mxu0 %v455
        %533 = vmatprep.subr.mxu0 %v458
        %534 = vmatpush1.msra.mxu0 %v457
        %535 = vmatprep.subr.mxu0 %v460
        %536 = vmatpush1.msra.mxu0 %v459
        %537 = vmatprep.subr.mxu0 %v462
        %538 = vmatpush1.msra.mxu0 %v461
        %539 = vmatprep.subr.mxu0 %v464
        %540 = vmatpush1.msra.mxu0 %v463
        %541 = vmatprep.subr.mxu0 %v466
        %542 = vmatpush1.msra.mxu0 %v465
        %543 = vmatprep.subr.mxu0 %v468
        %544 = vmatpush1.msra.mxu0 %v467
        %545 = vmatprep.subr.mxu0 %v470
        %546 = vmatpush1.msra.mxu0 %v469
        %547 = vmatprep.subr.mxu0 %v472
        %548 = vmatpush1.msra.mxu0 %v471
        %549 = vmatprep.subr.mxu0 %v474
        %550 = vmatpush1.msra.mxu0 %v473
        %551 = vmatprep.subr.mxu0 %v476
        %552 = vmatpush1.msra.mxu0 %v475
        %553 = vmatprep.mubr.f32.mxu0 %v412
        %554 = vmatmul.mubr.f32.gmra.mrb[0].mxu0 %v411
        %v555 = vpop.f32.mrb[0].mxu0
        %v556 = vadd.f32 %v482, %v555
        %v557 = vpop.f32.mrb[0].mxu0
        %v558 = vadd.f32 %v486, %v557
        %559 = vdwg.mxu0
        %v560 = vmul.f32 %v556, %v556
        %v561 = vmul.f32 %v558, %v558
        %v562 = vld [vmem:[%s5] sm:$0x3]
        %v564 = vlaneseq
        %v565 = vshrl.u32 %v564, 7
        %v566 = vsub.s32 0, %v565
        %v567 = vrot.slane %v562, %v566
        %v568 = vlaneseq
        %v569 = vshrl.u32 %v568, 7
        %v570 = vsub.s32 1, %v569
        %v571 = vrot.slane %v562, %v570
        %v574 = vmul.f32 %v560, %v567
        %v575 = vmul.f32 %v561, %v571
        %v576 = vadd.f32 %v574, %v575
        %577 = vadd.xlane.f32.xlu0 %v576
        %v578 = vpop.xlane.xlu0 %577
        %v579 = vld [vmem:[#allocation2] sm:$0x1]
        %v581 = vlaneseq
        %v582 = vshrl.u32 %v581, 7
        %v583 = vsub.s32 0, %v582
        %v584 = vrot.slane %v579, %v583
        %v586 = vadd.f32 %v578, %v584
        %vm587 = vcmask 7168
        %588 = vst.msk [vmem:[%s290] sm:$0xff] %vm587, %v586
        %p589 = scmp.lt.s32.totalorder %s21, 2
        %s590 = scalar_select %p589, %s21, 2
        %s591 = smul.addr %s590, 8
        %s592 = scalar_lea.vmem %s7, %s591
        // Predicated region
        $region53: #{tpu_custom_call.1} parent=47 // pred_check
          %p593 = pneg %p191
        $region54: #{tpu_custom_call.1} parent=47 // pred_check_branch
          %595 = sbr.rel (%p593) target = $region56
        $region55: #{tpu_custom_call.1} parent=47 // pred_region
          _
        $region56: #{tpu_custom_call.1} parent=47 // pred_fallthru
          _
      $region48: #{tpu_custom_call.1} parent=5 // pred_fallthru
        _
      %p596 = scmp.le.s32.totalorder 2, %s16
      // Predicated region
      $region57: #{tpu_custom_call.1} parent=5 // pred_check
        %p597 = pneg %p596
      $region58: #{tpu_custom_call.1} parent=5 // pred_check_branch
        %599 = sbr.rel (%p597) target = $region60
      $region59: #{tpu_custom_call.1} parent=5 // pred_region
        %s600 = ssub.s32 %s16, 2
        // Predicated region
        $region61: #{tpu_custom_call.1} parent=59 // pred_check
          %p601 = pneg %p197
        $region62: #{tpu_custom_call.1} parent=59 // pred_check_branch
          %603 = sbr.rel (%p601) target = $region64
        $region63: #{tpu_custom_call.1} parent=59 // pred_region
          %p604 = scmp.lt.s32.totalorder %s22, 2
          %s605 = scalar_select %p604, %s22, 2
          %s606 = smul.addr %s605, 8
          %s607 = scalar_lea.vmem %s7, %s606
        $region64: #{tpu_custom_call.1} parent=59 // pred_fallthru
          _
      $region60: #{tpu_custom_call.1} parent=5 // pred_fallthru
        _
    $region6: #{tpu_custom_call.1} parent=1 // loop_footer
      %s20 = sadd.s32 1, %s16
    $region7: #{tpu_custom_call.1} parent=1 // loop_footer_branch
      %15 = sbr.rel target = $region3
    $region8: #{tpu_custom_call.1} parent=1 // loop_exit
      _
    %608 = vsyncpa [#allocation4], 1
    %s609 = scalar_lea.sflag [#allocation4], 1
    %610 = vsyncpa %s609, 1

</llo_original>
